<compile_context>
chip_gen: v6e
topology: v6e:2x2x1
jax: 0.10.0
libtpu: 0.0.40
codegen_flags: <defaults>
</compile_context>

<pallas_src>
import math
from functools import partial

import jax
import jax.numpy as jnp
from jax.experimental import pallas as pl
from jax.experimental.pallas import tpu as pltpu


def _make_pv_stack_kernel(tb, n, m, d, matmul_dtype):
    """Kernel over grid (batch_tiles, num_blocks). tb = batch elems per tile."""
    inv_sqrt_d = 1.0 / math.sqrt(d)

    def kernel(point_ref, voxel_ref, wq_ref, bq_ref, wk_ref, bk_ref,
               wt_ref, bt_ref, gamma_ref, beta_ref, out_ref, p_acc):
        l = pl.program_id(1)

        # At the first block of this batch tile, load point features into the
        # resident f32 accumulator.
        @pl.when(l == 0)
        def _():
            p_acc[...] = point_ref[...].astype(jnp.float32)

        cast = lambda x: x.astype(matmul_dtype)

        p = p_acc[...]                  # (tb*n, d) f32, resident across blocks
        v = voxel_ref[...]              # (tb*m, d)

        # Batched Linear projections: single (tb*n, d)x(d, d) / (tb*m, d)x(d, d)
        # MXU matmuls, f32 accumulation; bias add in f32.
        q = jnp.dot(cast(p), cast(wq_ref[0]),
                    preferred_element_type=jnp.float32) + bq_ref[0]
        kv = jnp.dot(cast(v), cast(wk_ref[0]),
                     preferred_element_type=jnp.float32) + bk_ref[0]

        q3 = q.reshape(tb, n, d)
        kv3 = kv.reshape(tb, m, d)

        # attention_map = q @ kv^T / sqrt(d) — contract last dims of both
        # operands (no explicit transpose of kv).
        attn_map = jax.lax.dot_general(
            cast(q3), cast(kv3),
            dimension_numbers=(((2,), (2,)), ((0,), (0,))),
            preferred_element_type=jnp.float32) * inv_sqrt_d      # (tb, n, m)
        # attention = attention_map @ kv
        attn = jax.lax.dot_general(
            cast(attn_map), cast(kv3),
            dimension_numbers=(((2,), (1,)), ((0,), (0,))),
            preferred_element_type=jnp.float32)                   # (tb, n, d)

        # trans(attention - point): Linear -> LayerNorm -> ReLU, residual add.
        delta = attn.reshape(tb * n, d) - p
        t = jnp.dot(cast(delta), cast(wt_ref[0]),
                    preferred_element_type=jnp.float32) + bt_ref[0]

        # LayerNorm / ReLU / residual strictly in f32 (VPU path on all chips);
        # rsqrt goes to the EUP slot.
        mean = jnp.mean(t, axis=-1, keepdims=True)
        var = jnp.mean(jnp.square(t - mean), axis=-1, keepdims=True)
        ln = (t - mean) * jax.lax.rsqrt(var + 1e-5) * gamma_ref[0] + beta_ref[0]

        p_new = jnp.maximum(ln, 0.0) + p
        p_acc[...] = p_new

        # Only the final block result is written back to HBM.
        @pl.when(l == pl.num_programs(1) - 1)
        def _():
            out_ref[...] = p_new.astype(out_ref.dtype)

    return kernel


def point_voxel_attention(point, voxel, block_params_list, *,
                          batch_tile=None, matmul_dtype=jnp.float32):
    """Fused forward pass of the whole Point_Voxel_Block stack."""
    B, N, D = point.shape
    _, M, _ = voxel.shape
    L = len(block_params_list)

    # Stack per-block weights: (L, D, D) for matrices, (L, 1, D) for vectors.
    stacked = [jnp.stack([blk[i] for blk in block_params_list], axis=0)
               for i in range(8)]
    wq, bq, wk, bk, wt, bt, gamma, beta = stacked

    TB = B if batch_tile is None else batch_tile
    assert B % TB == 0, "batch_tile must divide B"
    nb = B // TB

    # 2-D row-major views so the projections batch over all rows of a tile.
    point2 = point.reshape(B * N, D)
    voxel2 = voxel.reshape(B * M, D)

    kernel = _make_pv_stack_kernel(TB, N, M, D, matmul_dtype)

    wmap = lambda b, l: (l, 0, 0)       # per-block weight slice
    out2 = pl.pallas_call(
        kernel,
        out_shape=jax.ShapeDtypeStruct((B * N, D), point.dtype),
        grid_spec=pltpu.PrefetchScalarGridSpec(
            num_scalar_prefetch=0,
            grid=(nb, L),
            in_specs=[
                pl.BlockSpec((TB * N, D), lambda b, l: (b, 0)),   # point rows
                pl.BlockSpec((TB * M, D), lambda b, l: (b, 0)),   # voxel rows
                pl.BlockSpec((1, D, D), wmap),                    # Wq
                pl.BlockSpec((1, 1, D), wmap),                    # bq
                pl.BlockSpec((1, D, D), wmap),                    # Wk
                pl.BlockSpec((1, 1, D), wmap),                    # bk
                pl.BlockSpec((1, D, D), wmap),                    # Wt
                pl.BlockSpec((1, 1, D), wmap),                    # bt
                pl.BlockSpec((1, 1, D), wmap),                    # gamma
                pl.BlockSpec((1, 1, D), wmap),                    # beta
            ],
            out_specs=pl.BlockSpec((TB * N, D), lambda b, l: (b, 0)),
            scratch_shapes=[pltpu.VMEM((TB * N, D), jnp.float32)],
        ),
        compiler_params=pltpu.CompilerParams(
            dimension_semantics=("parallel", "arbitrary")),
    )(point2, voxel2, wq, bq, wk, bk, wt, bt, gamma, beta)

    return out2.reshape(B, N, D)


def point_voxel_attention_ref(point, voxel, block_params_list):
    """Pure-JAX reference (matches the PyTorch module's forward)."""
    p = point
    d = p.shape[-1]
    for (wq, bq, wk, bk, wt, bt, gamma, beta) in block_params_list:
        q = p @ wq + bq
        kv = voxel @ wk + bk
        attn = (q @ jnp.swapaxes(kv, -1, -2) / math.sqrt(d)) @ kv
        t = (attn - p) @ wt + bt
        mean = jnp.mean(t, axis=-1, keepdims=True)
        var = jnp.mean(jnp.square(t - mean), axis=-1, keepdims=True)
        ln = (t - mean) / jnp.sqrt(var + 1e-5) * gamma + beta
        p = jnp.maximum(ln, 0.0) + p
    return p


def init_block_params(key, dims):
    # Deterministic synthetic init (PyTorch-Linear-style uniform bounds).
    # Weights stored in x @ W form.
    ks = jax.random.split(key, 6)
    bound = 1.0 / math.sqrt(dims)
    u = lambda k, shape: jax.random.uniform(k, shape, jnp.float32, -bound, bound)
    wq, bq = u(ks[0], (dims, dims)), u(ks[1], (1, dims))
    wk, bk = u(ks[2], (dims, dims)), u(ks[3], (1, dims))
    wt, bt = u(ks[4], (dims, dims)), u(ks[5], (1, dims))
    gamma = jnp.ones((1, dims), jnp.float32)
    beta = jnp.zeros((1, dims), jnp.float32)
    return (wq, bq, wk, bk, wt, bt, gamma, beta)


if __name__ == "__main__":
    dims = 32
    offset_attention_num = 2
    B, N, M = 2, 8, 8   # batch, #points, #voxels

    key = jax.random.PRNGKey(0)
    kp, kv_key, *kblocks = jax.random.split(key, 2 + offset_attention_num)
    point = jax.random.normal(kp, (B, N, dims), jnp.float32)
    voxel = jax.random.normal(kv_key, (B, M, dims), jnp.float32)
    params = [init_block_params(k, dims) for k in kblocks]

    ref = point_voxel_attention_ref(point, voxel, params)

    # f32 matmul path (exact match against reference).
    out = point_voxel_attention(point, voxel, params)
    out = jax.block_until_ready(out)
    assert out.shape == (B, N, dims)
    assert jnp.allclose(out, ref, atol=1e-4, rtol=1e-4), "f32 mismatch vs JAX reference"

    # bf16-operand / f32-accumulate fast path (v6e / v7x MXU); looser tolerance.
    out_bf16 = point_voxel_attention(point, voxel, params,
                                     matmul_dtype=jnp.bfloat16)
    out_bf16 = jax.block_until_ready(out_bf16)
    assert out_bf16.shape == (B, N, dims)
    assert jnp.allclose(out_bf16, ref, atol=2.5e-1, rtol=2.5e-1), "bf16 path diverged"

    print("KERNEL_OK")
</pallas_src>

<mosaic_0001>
module attributes {stable_mosaic.version = 11 : i64} {
  func.func @kernel(%arg0: i32, %arg1: i32, %arg2: memref<16x32xf32, #tpu.memory_space<vmem>>, %arg3: memref<16x32xf32, #tpu.memory_space<vmem>>, %arg4: memref<1x32x32xf32, #tpu.memory_space<vmem>>, %arg5: memref<1x1x32xf32, #tpu.memory_space<vmem>>, %arg6: memref<1x32x32xf32, #tpu.memory_space<vmem>>, %arg7: memref<1x1x32xf32, #tpu.memory_space<vmem>>, %arg8: memref<1x32x32xf32, #tpu.memory_space<vmem>>, %arg9: memref<1x1x32xf32, #tpu.memory_space<vmem>>, %arg10: memref<1x1x32xf32, #tpu.memory_space<vmem>>, %arg11: memref<1x1x32xf32, #tpu.memory_space<vmem>>, %arg12: memref<16x32xf32, #tpu.memory_space<vmem>>, %arg13: memref<16x32xf32, #tpu.memory_space<vmem>>) attributes {dimension_semantics = [#tpu.dimension_semantics<parallel>, #tpu.dimension_semantics<arbitrary>], iteration_bounds = array<i64: 1, 2>, scalar_prefetch = 0 : i64, scratch_operands = 1 : i64, tpu.core_type = #tpu.core_type<tc>, window_params = [{transform_indices = @transform_0, window_bounds = array<i64: 16, 32>}, {transform_indices = @transform_1, window_bounds = array<i64: 16, 32>}, {transform_indices = @transform_2, window_bounds = array<i64: 1, 32, 32>}, {transform_indices = @transform_3, window_bounds = array<i64: 1, 1, 32>}, {transform_indices = @transform_4, window_bounds = array<i64: 1, 32, 32>}, {transform_indices = @transform_5, window_bounds = array<i64: 1, 1, 32>}, {transform_indices = @transform_6, window_bounds = array<i64: 1, 32, 32>}, {transform_indices = @transform_7, window_bounds = array<i64: 1, 1, 32>}, {transform_indices = @transform_8, window_bounds = array<i64: 1, 1, 32>}, {transform_indices = @transform_9, window_bounds = array<i64: 1, 1, 32>}, {transform_indices = @transform_10, window_bounds = array<i64: 16, 32>}]} {
    %c0_i32 = arith.constant 0 : i32
    %0 = arith.cmpi eq, %arg1, %c0_i32 : i32
    %1 = arith.extui %0 : i1 to i32
    %c0_i32_0 = arith.constant 0 : i32
    %2 = arith.cmpi ne, %1, %c0_i32_0 : i32
    scf.if %2 {
      %c0_42 = arith.constant 0 : index
      %c0_43 = arith.constant 0 : index
      %67 = vector.load %arg2[%c0_42, %c0_43] : memref<16x32xf32, #tpu.memory_space<vmem>>, vector<16x32xf32>
      %c0_44 = arith.constant 0 : index
      %c0_45 = arith.constant 0 : index
      %68 = vector.load %arg13[%c0_44, %c0_45] : memref<16x32xf32, #tpu.memory_space<vmem>>, vector<16x32xf32>
      tpu.vector_store %arg13[%c0_44, %c0_45], %67 {strides = array<i32>} : memref<16x32xf32, #tpu.memory_space<vmem>>, vector<16x32xf32>,
    } else {
    }
    %c0 = arith.constant 0 : index
    %c0_1 = arith.constant 0 : index
    %3 = vector.load %arg13[%c0, %c0_1] : memref<16x32xf32, #tpu.memory_space<vmem>>, vector<16x32xf32>
    %c0_2 = arith.constant 0 : index
    %c0_3 = arith.constant 0 : index
    %4 = vector.load %arg3[%c0_2, %c0_3] : memref<16x32xf32, #tpu.memory_space<vmem>>, vector<16x32xf32>
    %c0_4 = arith.constant 0 : index
    %c0_5 = arith.constant 0 : index
    %c0_6 = arith.constant 0 : index
    %5 = vector.load %arg4[%c0_4, %c0_5, %c0_6] : memref<1x32x32xf32, #tpu.memory_space<vmem>>, vector<1x32x32xf32>
    %6 = vector.shape_cast %5 : vector<1x32x32xf32> to vector<32x32xf32>
    %cst = arith.constant dense<0.000000e+00> : vector<16x32xf32>
    %7 = tpu.matmul %3, %6, %cst {dimension_numbers = #tpu.dot_dimension_numbers<[1], [0], [0], [1], [0, 0, 1, 1], [], []>} : vector<16x32xf32>, vector<32x32xf32>, vector<16x32xf32> -> vector<16x32xf32>
    %c0_7 = arith.constant 0 : index
    %c0_8 = arith.constant 0 : index
    %c0_9 = arith.constant 0 : index
    %8 = vector.load %arg5[%c0_7, %c0_8, %c0_9] : memref<1x1x32xf32, #tpu.memory_space<vmem>>, vector<1x1x32xf32>
    %9 = vector.shape_cast %8 : vector<1x1x32xf32> to vector<1x32xf32>
    %10 = vector.broadcast %9 : vector<1x32xf32> to vector<16x32xf32>
    %11 = arith.addf %7, %10 : vector<16x32xf32>
    %c0_10 = arith.constant 0 : index
    %c0_11 = arith.constant 0 : index
    %c0_12 = arith.constant 0 : index
    %12 = vector.load %arg6[%c0_10, %c0_11, %c0_12] : memref<1x32x32xf32, #tpu.memory_space<vmem>>, vector<1x32x32xf32>
    %13 = vector.shape_cast %12 : vector<1x32x32xf32> to vector<32x32xf32>
    %cst_13 = arith.constant dense<0.000000e+00> : vector<16x32xf32>
    %14 = tpu.matmul %4, %13, %cst_13 {dimension_numbers = #tpu.dot_dimension_numbers<[1], [0], [0], [1], [0, 0, 1, 1], [], []>} : vector<16x32xf32>, vector<32x32xf32>, vector<16x32xf32> -> vector<16x32xf32>
    %c0_14 = arith.constant 0 : index
    %c0_15 = arith.constant 0 : index
    %c0_16 = arith.constant 0 : index
    %15 = vector.load %arg7[%c0_14, %c0_15, %c0_16] : memref<1x1x32xf32, #tpu.memory_space<vmem>>, vector<1x1x32xf32>
    %16 = vector.shape_cast %15 : vector<1x1x32xf32> to vector<1x32xf32>
    %17 = vector.broadcast %16 : vector<1x32xf32> to vector<16x32xf32>
    %18 = arith.addf %14, %17 : vector<16x32xf32>
    %19 = vector.shape_cast %11 : vector<16x32xf32> to vector<2x8x32xf32>
    %20 = vector.shape_cast %18 : vector<16x32xf32> to vector<2x8x32xf32>
    %cst_17 = arith.constant dense<0.000000e+00> : vector<2x8x8xf32>
    %21 = tpu.matmul %19, %20, %cst_17 {dimension_numbers = #tpu.dot_dimension_numbers<[2], [2], [1], [1], [0, 0, 0, 1, 1, 1], [0], [0]>} : vector<2x8x32xf32>, vector<2x8x32xf32>, vector<2x8x8xf32> -> vector<2x8x8xf32>
    %cst_18 = arith.constant 0.176776692 : f32
    %22 = vector.broadcast %cst_18 : f32 to vector<2x8x8xf32>
    %23 = arith.mulf %21, %22 : vector<2x8x8xf32>
    %cst_19 = arith.constant dense<0.000000e+00> : vector<2x8x32xf32>
    %24 = tpu.matmul %23, %20, %cst_19 {dimension_numbers = #tpu.dot_dimension_numbers<[2], [1], [1], [2], [0, 0, 0, 1, 1, 2], [0], [0]>} : vector<2x8x8xf32>, vector<2x8x32xf32>, vector<2x8x32xf32> -> vector<2x8x32xf32>
    %25 = vector.shape_cast %24 : vector<2x8x32xf32> to vector<16x32xf32>
    %26 = arith.subf %25, %3 : vector<16x32xf32>
    %c0_20 = arith.constant 0 : index
    %c0_21 = arith.constant 0 : index
    %c0_22 = arith.constant 0 : index
    %27 = vector.load %arg8[%c0_20, %c0_21, %c0_22] : memref<1x32x32xf32, #tpu.memory_space<vmem>>, vector<1x32x32xf32>
    %28 = vector.shape_cast %27 : vector<1x32x32xf32> to vector<32x32xf32>
    %cst_23 = arith.constant dense<0.000000e+00> : vector<16x32xf32>
    %29 = tpu.matmul %26, %28, %cst_23 {dimension_numbers = #tpu.dot_dimension_numbers<[1], [0], [0], [1], [0, 0, 1, 1], [], []>} : vector<16x32xf32>, vector<32x32xf32>, vector<16x32xf32> -> vector<16x32xf32>
    %c0_24 = arith.constant 0 : index
    %c0_25 = arith.constant 0 : index
    %c0_26 = arith.constant 0 : index
    %30 = vector.load %arg9[%c0_24, %c0_25, %c0_26] : memref<1x1x32xf32, #tpu.memory_space<vmem>>, vector<1x1x32xf32>
    %31 = vector.shape_cast %30 : vector<1x1x32xf32> to vector<1x32xf32>
    %32 = vector.broadcast %31 : vector<1x32xf32> to vector<16x32xf32>
    %33 = arith.addf %29, %32 : vector<16x32xf32>
    %cst_27 = arith.constant dense<0.000000e+00> : vector<16xf32>
    %34 = vector.multi_reduction <add>, %33, %cst_27 [1] : vector<16x32xf32> to vector<16xf32>
    %35 = vector.shape_cast %34 : vector<16xf32> to vector<16x1xf32>
    %cst_28 = arith.constant 3.200000e+01 : f32
    %36 = vector.broadcast %cst_28 : f32 to vector<16x1xf32>
    %37 = arith.divf %35, %36 : vector<16x1xf32>
    %38 = vector.broadcast %37 : vector<16x1xf32> to vector<16x32xf32>
    %39 = arith.subf %33, %38 : vector<16x32xf32>
    %40 = arith.mulf %39, %39 : vector<16x32xf32>
    %cst_29 = arith.constant dense<0.000000e+00> : vector<16xf32>
    %41 = vector.multi_reduction <add>, %40, %cst_29 [1] : vector<16x32xf32> to vector<16xf32>
    %42 = vector.shape_cast %41 : vector<16xf32> to vector<16x1xf32>
    %cst_30 = arith.constant 3.200000e+01 : f32
    %43 = vector.broadcast %cst_30 : f32 to vector<16x1xf32>
    %44 = arith.divf %42, %43 : vector<16x1xf32>
    %45 = vector.broadcast %37 : vector<16x1xf32> to vector<16x32xf32>
    %46 = arith.subf %33, %45 : vector<16x32xf32>
    %cst_31 = arith.constant 9.99999974E-6 : f32
    %47 = vector.broadcast %cst_31 : f32 to vector<16x1xf32>
    %48 = arith.addf %44, %47 : vector<16x1xf32>
    %49 = math.rsqrt %48 : vector<16x1xf32>
    %50 = vector.broadcast %49 : vector<16x1xf32> to vector<16x32xf32>
    %51 = arith.mulf %46, %50 : vector<16x32xf32>
    %c0_32 = arith.constant 0 : index
    %c0_33 = arith.constant 0 : index
    %c0_34 = arith.constant 0 : index
    %52 = vector.load %arg10[%c0_32, %c0_33, %c0_34] : memref<1x1x32xf32, #tpu.memory_space<vmem>>, vector<1x1x32xf32>
    %53 = vector.shape_cast %52 : vector<1x1x32xf32> to vector<1x32xf32>
    %54 = vector.broadcast %53 : vector<1x32xf32> to vector<16x32xf32>
    %55 = arith.mulf %51, %54 : vector<16x32xf32>
    %c0_35 = arith.constant 0 : index
    %c0_36 = arith.constant 0 : index
    %c0_37 = arith.constant 0 : index
    %56 = vector.load %arg11[%c0_35, %c0_36, %c0_37] : memref<1x1x32xf32, #tpu.memory_space<vmem>>, vector<1x1x32xf32>
    %57 = vector.shape_cast %56 : vector<1x1x32xf32> to vector<1x32xf32>
    %58 = vector.broadcast %57 : vector<1x32xf32> to vector<16x32xf32>
    %59 = arith.addf %55, %58 : vector<16x32xf32>
    %cst_38 = arith.constant 0.000000e+00 : f32
    %60 = vector.broadcast %cst_38 : f32 to vector<16x32xf32>
    %61 = arith.maximumf %59, %60 : vector<16x32xf32>
    %62 = arith.addf %61, %3 : vector<16x32xf32>
    %c0_39 = arith.constant 0 : index
    %c0_40 = arith.constant 0 : index
    %63 = vector.load %arg13[%c0_39, %c0_40] : memref<16x32xf32, #tpu.memory_space<vmem>>, vector<16x32xf32>
    tpu.vector_store %arg13[%c0_39, %c0_40], %62 {strides = array<i32>} : memref<16x32xf32, #tpu.memory_space<vmem>>, vector<16x32xf32>,
    %c1_i32 = arith.constant 1 : i32
    %64 = arith.cmpi eq, %arg1, %c1_i32 : i32
    %65 = arith.extui %64 : i1 to i32
    %c0_i32_41 = arith.constant 0 : i32
    %66 = arith.cmpi ne, %65, %c0_i32_41 : i32
    scf.if %66 {
      %c0_42 = arith.constant 0 : index
      %c0_43 = arith.constant 0 : index
      %67 = vector.load %arg12[%c0_42, %c0_43] : memref<16x32xf32, #tpu.memory_space<vmem>>, vector<16x32xf32>
      tpu.vector_store %arg12[%c0_42, %c0_43], %62 {strides = array<i32>} : memref<16x32xf32, #tpu.memory_space<vmem>>, vector<16x32xf32>,
    } else {
    }
    return
  }
  func.func @transform_0(%arg0: i32, %arg1: i32) -> (i32, i32) {
    %c0_i32 = arith.constant 0 : i32
    %c0_i32_0 = arith.constant 0 : i32
    return %arg0, %c0_i32 : i32, i32
  }
  func.func @transform_1(%arg0: i32, %arg1: i32) -> (i32, i32) {
    %c0_i32 = arith.constant 0 : i32
    %c0_i32_0 = arith.constant 0 : i32
    return %arg0, %c0_i32 : i32, i32
  }
  func.func @transform_2(%arg0: i32, %arg1: i32) -> (i32, i32, i32) {
    %c0_i32 = arith.constant 0 : i32
    %c0_i32_0 = arith.constant 0 : i32
    %c0_i32_1 = arith.constant 0 : i32
    return %arg1, %c0_i32, %c0_i32_0 : i32, i32, i32
  }
  func.func @transform_3(%arg0: i32, %arg1: i32) -> (i32, i32, i32) {
    %c0_i32 = arith.constant 0 : i32
    %c0_i32_0 = arith.constant 0 : i32
    %c0_i32_1 = arith.constant 0 : i32
    return %arg1, %c0_i32, %c0_i32_0 : i32, i32, i32
  }
  func.func @transform_4(%arg0: i32, %arg1: i32) -> (i32, i32, i32) {
    %c0_i32 = arith.constant 0 : i32
    %c0_i32_0 = arith.constant 0 : i32
    %c0_i32_1 = arith.constant 0 : i32
    return %arg1, %c0_i32, %c0_i32_0 : i32, i32, i32
  }
  func.func @transform_5(%arg0: i32, %arg1: i32) -> (i32, i32, i32) {
    %c0_i32 = arith.constant 0 : i32
    %c0_i32_0 = arith.constant 0 : i32
    %c0_i32_1 = arith.constant 0 : i32
    return %arg1, %c0_i32, %c0_i32_0 : i32, i32, i32
  }
  func.func @transform_6(%arg0: i32, %arg1: i32) -> (i32, i32, i32) {
    %c0_i32 = arith.constant 0 : i32
    %c0_i32_0 = arith.constant 0 : i32
    %c0_i32_1 = arith.constant 0 : i32
    return %arg1, %c0_i32, %c0_i32_0 : i32, i32, i32
  }
  func.func @transform_7(%arg0: i32, %arg1: i32) -> (i32, i32, i32) {
    %c0_i32 = arith.constant 0 : i32
    %c0_i32_0 = arith.constant 0 : i32
    %c0_i32_1 = arith.constant 0 : i32
    return %arg1, %c0_i32, %c0_i32_0 : i32, i32, i32
  }
  func.func @transform_8(%arg0: i32, %arg1: i32) -> (i32, i32, i32) {
    %c0_i32 = arith.constant 0 : i32
    %c0_i32_0 = arith.constant 0 : i32
    %c0_i32_1 = arith.constant 0 : i32
    return %arg1, %c0_i32, %c0_i32_0 : i32, i32, i32
  }
  func.func @transform_9(%arg0: i32, %arg1: i32) -> (i32, i32, i32) {
    %c0_i32 = arith.constant 0 : i32
    %c0_i32_0 = arith.constant 0 : i32
    %c0_i32_1 = arith.constant 0 : i32
    return %arg1, %c0_i32, %c0_i32_0 : i32, i32, i32
  }
  func.func @transform_10(%arg0: i32, %arg1: i32) -> (i32, i32) {
    %c0_i32 = arith.constant 0 : i32
    %c0_i32_0 = arith.constant 0 : i32
    return %arg0, %c0_i32 : i32, i32
  }
}

</mosaic_0001>

<llo_original>
// kernel: tpu_custom_call.1
$region0: #{tpu_custom_call.1}
  #allocation0 [shape = 'u32[]', space=smem, size = 0x4, offset = 0x4, fixed_abs, tag = 'smem constant byte address 0x4 - core index']
  #allocation1 [shape = 'u32[144,128]{1,0:T(1,128)}', space=vmem, size = 0x12000, scoped, tag = 'internal scratch']
  #allocation2 [shape = 'f32[16,32]{1,0:T(8,128)}', space=vmem, size = 0x2000, scoped, tag = 'scratch operand']
  %s0 = inlined_call_operand.hbm [shape: f32[16,32], index: 0, kind: input, shape index: {}]
  %s1 = inlined_call_operand.hbm [shape: f32[16,32], index: 1, kind: input, shape index: {}]
  %s2 = inlined_call_operand.hbm [shape: f32[2,32,32], index: 2, kind: input, shape index: {}]
  %s3 = inlined_call_operand.vmem [shape: f32[2,1,32], index: 3, kind: input, shape index: {}]
  %s4 = inlined_call_operand.hbm [shape: f32[2,32,32], index: 4, kind: input, shape index: {}]
  %s5 = inlined_call_operand.vmem [shape: f32[2,1,32], index: 5, kind: input, shape index: {}]
  %s6 = inlined_call_operand.hbm [shape: f32[2,32,32], index: 6, kind: input, shape index: {}]
  %s7 = inlined_call_operand.vmem [shape: f32[2,1,32], index: 7, kind: input, shape index: {}]
  %s8 = inlined_call_operand.vmem [shape: f32[2,1,32], index: 8, kind: input, shape index: {}]
  %s9 = inlined_call_operand.vmem [shape: f32[2,1,32], index: 9, kind: input, shape index: {}]
  %s10 = inlined_call_operand.hbm [shape: f32[16,32], index: 10, kind: output, shape index: {}]
  %s11 = sld [smem:[#allocation0]]
  $region101: #{tpu_custom_call.1} parent=0
    _
  %s13 = ssub.s32 1, %s11
  %s14 = scalar_select 0, %s13, %s11
  $region1: #{tpu_custom_call.1} parent=0
    #allocation3 [shape = 'u8[8192]{0}', space=vmem, size = 0x2000, scoped, tag = 'input window, operand 0, single buffered']
    #allocation4 [shape = 's32[2]{0}', space=sflag, size = 0x8, scoped, tag = 'scoped memory for tpu_custom_call.1']
    #allocation5 [shape = 's32[2]{0}', space=sflag, size = 0x8, scoped, tag = 'scoped memory for tpu_custom_call.1']
    #allocation6 [shape = 'u8[8192]{0}', space=vmem, size = 0x2000, scoped, tag = 'input window, operand 1, single buffered']
    #allocation7 [shape = 's32[1]{0}', space=sflag, size = 0x4, scoped, tag = 'scoped memory for tpu_custom_call.1']
    #allocation8 [shape = 'u8[32768]{0}', space=vmem, size = 0x8000, scoped, tag = 'input window, operand 2']
    #allocation9 [shape = 'u8[32768]{0}', space=vmem, size = 0x8000, scoped, tag = 'input window, operand 4']
    #allocation10 [shape = 'u8[32768]{0}', space=vmem, size = 0x8000, scoped, tag = 'input window, operand 6']
    #allocation11 [shape = 'u8[8192]{0}', space=vmem, size = 0x2000, scoped, tag = 'output window, operand 0, single buffered']
    %15 = vsyncpa [#allocation4], 0
    %16 = vsyncpa [#allocation7], 0
    %17 = vsyncpa [#allocation5], 0
    loop: start=0, step=1, limit=4
    $region2: #{tpu_custom_call.1} parent=1 // loop_pre_header
      _
    $region3: #{tpu_custom_call.1} parent=1 // loop_header
      %s19 = sphi 0, %s23
      %p20 = scmp.ge.s32.totalorder %s19, 4
      %s26 = sphi 0, %s38
      %s27 = sphi 0, %s34
      %s28 = sphi 0, %s26
      %s29 = sphi 0, %s27
      %s30 = sphi 0, %s28
      %s31 = sphi 0, %s29
      %s41 = sphi 0, %s43
      %s44 = sphi 0, %s41
      %s45 = sphi 0, %s44
      %s61 = sphi 0, %s45
      %s67 = sphi 0, %s69
      %s70 = sphi 0, %s67
      %s71 = sphi 0, %s70
      %s87 = sphi 0, %s71
      %s93 = sphi 0, %s95
      %s96 = sphi 0, %s93
      %s97 = sphi 0, %s96
      %s113 = sphi 0, %s97
      %s119 = sphi 0, %s121
      %s122 = sphi 0, %s119
      %s123 = sphi 0, %s122
      %s139 = sphi 0, %s123
      %s145 = sphi 0, %s147
      %s148 = sphi 0, %s145
      %s149 = sphi 0, %s148
      %s165 = sphi 0, %s149
      %s171 = sphi 0, %s173
      %s174 = sphi 0, %s171
      %s175 = sphi 0, %s174
      %s191 = sphi 0, %s175
      %s197 = sphi 0, %s199
      %s200 = sphi 0, %s197
      %s201 = sphi 0, %s200
      %s217 = sphi 0, %s201
      %s223 = sphi 0, %s225
      %s226 = sphi 0, %s223
      %s227 = sphi 0, %s226
      %s243 = sphi 0, %s227
      %s249 = sphi 0, %s251
      %s252 = sphi 0, %s249
      %s253 = sphi 0, %s252
      %s269 = sphi 0, %s253
      %s275 = sphi 0, %s277
      %s278 = sphi 0, %s275
      %s279 = sphi 0, %s278
      %s295 = sphi 0, %s279
      %s301 = sphi 0, %s303
      %s304 = sphi 0, %s301
      %s305 = sphi 0, %s304
      %s321 = sphi 0, %s305
    $region4: #{tpu_custom_call.1} parent=1 // loop_header_branch
      %22 = sbr.rel (%p20) target = $region8
    $region5: #{tpu_custom_call.1} parent=1 // loop_body
      %s24 = ssub.s32 %s19, 1
      %s25 = ssub.s32 %s19, 2
      %s32 = sadd.s32 1, %s27
      %p33 = scmp.ge.s32.totalorder %s32, 2
      %s34 = scalar_select %p33, 0, %s32
      %s35 = sadd.s32 1, %s26
      %s36 = scalar_select %p33, %s35, %s26
      %p37 = scmp.ge.s32.totalorder %s36, 1
      %s38 = scalar_select %p37, 0, %s36
      %s39 = ssub.s32 %s26, %s38
      %p40 = scmp.eq.s32.totalorder %s39, 0
      %s42 = sadd.s32 %s41, 1
      %s43 = scalar_select %p40, %s41, %s42
      %p46 = pneg %p40
      %p47 = scmp.eq.s32.totalorder %s19, 1
      %p48 = por %p46, %p47
      %p49 = scmp.ne.s32.totalorder %s41, %s44
      %p50 = scmp.eq.s32.totalorder %s19, 0
      %p51 = por %p49, %p50
      %p52 = scmp.ne.s32.totalorder %s41, %s44
      %p53 = scmp.eq.s32.totalorder %s24, 1
      %p54 = por %p52, %p53
      %p55 = scmp.ne.s32.totalorder %s44, %s45
      %p56 = scmp.eq.s32.totalorder %s24, 0
      %p57 = por %p55, %p56
      %p58 = scmp.ne.s32.totalorder %s44, %s45
      %p59 = scmp.eq.s32.totalorder %s25, 1
      %p60 = por %p58, %p59
      %p62 = scmp.ne.s32.totalorder %s45, %s61
      %p63 = scmp.eq.s32.totalorder %s25, 0
      %p64 = por %p62, %p63
      %s65 = ssub.s32 %s26, %s38
      %p66 = scmp.eq.s32.totalorder %s65, 0
      %s68 = sadd.s32 %s67, 1
      %s69 = scalar_select %p66, %s67, %s68
      %p72 = pneg %p66
      %p73 = scmp.eq.s32.totalorder %s19, 1
      %p74 = por %p72, %p73
      %p75 = scmp.ne.s32.totalorder %s67, %s70
      %p76 = scmp.eq.s32.totalorder %s19, 0
      %p77 = por %p75, %p76
      %p78 = scmp.ne.s32.totalorder %s67, %s70
      %p79 = scmp.eq.s32.totalorder %s24, 1
      %p80 = por %p78, %p79
      %p81 = scmp.ne.s32.totalorder %s70, %s71
      %p82 = scmp.eq.s32.totalorder %s24, 0
      %p83 = por %p81, %p82
      %p84 = scmp.ne.s32.totalorder %s70, %s71
      %p85 = scmp.eq.s32.totalorder %s25, 1
      %p86 = por %p84, %p85
      %p88 = scmp.ne.s32.totalorder %s71, %s87
      %p89 = scmp.eq.s32.totalorder %s25, 0
      %p90 = por %p88, %p89
      %s91 = ssub.s32 %s27, %s34
      %p92 = scmp.eq.s32.totalorder %s91, 0
      %s94 = sadd.s32 %s93, 1
      %s95 = scalar_select %p92, %s93, %s94
      %p98 = pneg %p92
      %p99 = scmp.eq.s32.totalorder %s19, 1
      %p100 = por %p98, %p99
      %p101 = scmp.ne.s32.totalorder %s93, %s96
      %p102 = scmp.eq.s32.totalorder %s19, 0
      %p103 = por %p101, %p102
      %p104 = scmp.ne.s32.totalorder %s93, %s96
      %p105 = scmp.eq.s32.totalorder %s24, 1
      %p106 = por %p104, %p105
      %p107 = scmp.ne.s32.totalorder %s96, %s97
      %p108 = scmp.eq.s32.totalorder %s24, 0
      %p109 = por %p107, %p108
      %p110 = scmp.ne.s32.totalorder %s96, %s97
      %p111 = scmp.eq.s32.totalorder %s25, 1
      %p112 = por %p110, %p111
      %p114 = scmp.ne.s32.totalorder %s97, %s113
      %p115 = scmp.eq.s32.totalorder %s25, 0
      %p116 = por %p114, %p115
      %s117 = ssub.s32 %s27, %s34
      %p118 = scmp.eq.s32.totalorder %s117, 0
      %s120 = sadd.s32 %s119, 1
      %s121 = scalar_select %p118, %s119, %s120
      %p124 = pneg %p118
      %p125 = scmp.eq.s32.totalorder %s19, 1
      %p126 = por %p124, %p125
      %p127 = scmp.ne.s32.totalorder %s119, %s122
      %p128 = scmp.eq.s32.totalorder %s19, 0
      %p129 = por %p127, %p128
      %p130 = scmp.ne.s32.totalorder %s119, %s122
      %p131 = scmp.eq.s32.totalorder %s24, 1
      %p132 = por %p130, %p131
      %p133 = scmp.ne.s32.totalorder %s122, %s123
      %p134 = scmp.eq.s32.totalorder %s24, 0
      %p135 = por %p133, %p134
      %p136 = scmp.ne.s32.totalorder %s122, %s123
      %p137 = scmp.eq.s32.totalorder %s25, 1
      %p138 = por %p136, %p137
      %p140 = scmp.ne.s32.totalorder %s123, %s139
      %p141 = scmp.eq.s32.totalorder %s25, 0
      %p142 = por %p140, %p141
      %s143 = ssub.s32 %s27, %s34
      %p144 = scmp.eq.s32.totalorder %s143, 0
      %s146 = sadd.s32 %s145, 1
      %s147 = scalar_select %p144, %s145, %s146
      %p150 = pneg %p144
      %p151 = scmp.eq.s32.totalorder %s19, 1
      %p152 = por %p150, %p151
      %p153 = scmp.ne.s32.totalorder %s145, %s148
      %p154 = scmp.eq.s32.totalorder %s19, 0
      %p155 = por %p153, %p154
      %p156 = scmp.ne.s32.totalorder %s145, %s148
      %p157 = scmp.eq.s32.totalorder %s24, 1
      %p158 = por %p156, %p157
      %p159 = scmp.ne.s32.totalorder %s148, %s149
      %p160 = scmp.eq.s32.totalorder %s24, 0
      %p161 = por %p159, %p160
      %p162 = scmp.ne.s32.totalorder %s148, %s149
      %p163 = scmp.eq.s32.totalorder %s25, 1
      %p164 = por %p162, %p163
      %p166 = scmp.ne.s32.totalorder %s149, %s165
      %p167 = scmp.eq.s32.totalorder %s25, 0
      %p168 = por %p166, %p167
      %s169 = ssub.s32 %s27, %s34
      %p170 = scmp.eq.s32.totalorder %s169, 0
      %s172 = sadd.s32 %s171, 1
      %s173 = scalar_select %p170, %s171, %s172
      %p176 = pneg %p170
      %p177 = scmp.eq.s32.totalorder %s19, 1
      %p178 = por %p176, %p177
      %p179 = scmp.ne.s32.totalorder %s171, %s174
      %p180 = scmp.eq.s32.totalorder %s19, 0
      %p181 = por %p179, %p180
      %p182 = scmp.ne.s32.totalorder %s171, %s174
      %p183 = scmp.eq.s32.totalorder %s24, 1
      %p184 = por %p182, %p183
      %p185 = scmp.ne.s32.totalorder %s174, %s175
      %p186 = scmp.eq.s32.totalorder %s24, 0
      %p187 = por %p185, %p186
      %p188 = scmp.ne.s32.totalorder %s174, %s175
      %p189 = scmp.eq.s32.totalorder %s25, 1
      %p190 = por %p188, %p189
      %p192 = scmp.ne.s32.totalorder %s175, %s191
      %p193 = scmp.eq.s32.totalorder %s25, 0
      %p194 = por %p192, %p193
      %s195 = ssub.s32 %s27, %s34
      %p196 = scmp.eq.s32.totalorder %s195, 0
      %s198 = sadd.s32 %s197, 1
      %s199 = scalar_select %p196, %s197, %s198
      %p202 = pneg %p196
      %p203 = scmp.eq.s32.totalorder %s19, 1
      %p204 = por %p202, %p203
      %p205 = scmp.ne.s32.totalorder %s197, %s200
      %p206 = scmp.eq.s32.totalorder %s19, 0
      %p207 = por %p205, %p206
      %p208 = scmp.ne.s32.totalorder %s197, %s200
      %p209 = scmp.eq.s32.totalorder %s24, 1
      %p210 = por %p208, %p209
      %p211 = scmp.ne.s32.totalorder %s200, %s201
      %p212 = scmp.eq.s32.totalorder %s24, 0
      %p213 = por %p211, %p212
      %p214 = scmp.ne.s32.totalorder %s200, %s201
      %p215 = scmp.eq.s32.totalorder %s25, 1
      %p216 = por %p214, %p215
      %p218 = scmp.ne.s32.totalorder %s201, %s217
      %p219 = scmp.eq.s32.totalorder %s25, 0
      %p220 = por %p218, %p219
      %s221 = ssub.s32 %s27, %s34
      %p222 = scmp.eq.s32.totalorder %s221, 0
      %s224 = sadd.s32 %s223, 1
      %s225 = scalar_select %p222, %s223, %s224
      %p228 = pneg %p222
      %p229 = scmp.eq.s32.totalorder %s19, 1
      %p230 = por %p228, %p229
      %p231 = scmp.ne.s32.totalorder %s223, %s226
      %p232 = scmp.eq.s32.totalorder %s19, 0
      %p233 = por %p231, %p232
      %p234 = scmp.ne.s32.totalorder %s223, %s226
      %p235 = scmp.eq.s32.totalorder %s24, 1
      %p236 = por %p234, %p235
      %p237 = scmp.ne.s32.totalorder %s226, %s227
      %p238 = scmp.eq.s32.totalorder %s24, 0
      %p239 = por %p237, %p238
      %p240 = scmp.ne.s32.totalorder %s226, %s227
      %p241 = scmp.eq.s32.totalorder %s25, 1
      %p242 = por %p240, %p241
      %p244 = scmp.ne.s32.totalorder %s227, %s243
      %p245 = scmp.eq.s32.totalorder %s25, 0
      %p246 = por %p244, %p245
      %s247 = ssub.s32 %s27, %s34
      %p248 = scmp.eq.s32.totalorder %s247, 0
      %s250 = sadd.s32 %s249, 1
      %s251 = scalar_select %p248, %s249, %s250
      %p254 = pneg %p248
      %p255 = scmp.eq.s32.totalorder %s19, 1
      %p256 = por %p254, %p255
      %p257 = scmp.ne.s32.totalorder %s249, %s252
      %p258 = scmp.eq.s32.totalorder %s19, 0
      %p259 = por %p257, %p258
      %p260 = scmp.ne.s32.totalorder %s249, %s252
      %p261 = scmp.eq.s32.totalorder %s24, 1
      %p262 = por %p260, %p261
      %p263 = scmp.ne.s32.totalorder %s252, %s253
      %p264 = scmp.eq.s32.totalorder %s24, 0
      %p265 = por %p263, %p264
      %p266 = scmp.ne.s32.totalorder %s252, %s253
      %p267 = scmp.eq.s32.totalorder %s25, 1
      %p268 = por %p266, %p267
      %p270 = scmp.ne.s32.totalorder %s253, %s269
      %p271 = scmp.eq.s32.totalorder %s25, 0
      %p272 = por %p270, %p271
      %s273 = ssub.s32 %s27, %s34
      %p274 = scmp.eq.s32.totalorder %s273, 0
      %s276 = sadd.s32 %s275, 1
      %s277 = scalar_select %p274, %s275, %s276
      %p280 = pneg %p274
      %p281 = scmp.eq.s32.totalorder %s19, 1
      %p282 = por %p280, %p281
      %p283 = scmp.ne.s32.totalorder %s275, %s278
      %p284 = scmp.eq.s32.totalorder %s19, 0
      %p285 = por %p283, %p284
      %p286 = scmp.ne.s32.totalorder %s275, %s278
      %p287 = scmp.eq.s32.totalorder %s24, 1
      %p288 = por %p286, %p287
      %p289 = scmp.ne.s32.totalorder %s278, %s279
      %p290 = scmp.eq.s32.totalorder %s24, 0
      %p291 = por %p289, %p290
      %p292 = scmp.ne.s32.totalorder %s278, %s279
      %p293 = scmp.eq.s32.totalorder %s25, 1
      %p294 = por %p292, %p293
      %p296 = scmp.ne.s32.totalorder %s279, %s295
      %p297 = scmp.eq.s32.totalorder %s25, 0
      %p298 = por %p296, %p297
      %s299 = ssub.s32 %s26, %s38
      %p300 = scmp.eq.s32.totalorder %s299, 0
      %s302 = sadd.s32 %s301, 1
      %s303 = scalar_select %p300, %s301, %s302
      %p306 = pneg %p300
      %p307 = scmp.eq.s32.totalorder %s19, 1
      %p308 = por %p306, %p307
      %p309 = scmp.ne.s32.totalorder %s301, %s304
      %p310 = scmp.eq.s32.totalorder %s19, 0
      %p311 = por %p309, %p310
      %p312 = scmp.ne.s32.totalorder %s301, %s304
      %p313 = scmp.eq.s32.totalorder %s24, 1
      %p314 = por %p312, %p313
      %p315 = scmp.ne.s32.totalorder %s304, %s305
      %p316 = scmp.eq.s32.totalorder %s24, 0
      %p317 = por %p315, %p316
      %p318 = scmp.ne.s32.totalorder %s304, %s305
      %p319 = scmp.eq.s32.totalorder %s25, 1
      %p320 = por %p318, %p319
      %p322 = scmp.ne.s32.totalorder %s305, %s321
      %p323 = scmp.eq.s32.totalorder %s25, 0
      %p324 = por %p322, %p323
      %p325 = scmp.le.s32.totalorder 1, %s19
      %p326 = scmp.lt.s32.totalorder %s19, 3
      %p327 = pnand %p325, %p326
      %p328 = pneg %p327
      // Predicated region
      $region9: #{tpu_custom_call.1} parent=5 // pred_check
        _
      $region10: #{tpu_custom_call.1} parent=5 // pred_check_branch
        %330 = sbr.rel (%p327) target = $region12
      $region11: #{tpu_custom_call.1} parent=5 // pred_region
        %s331 = ssub.s32 %s19, 1
        // Predicated region
        $region13: #{tpu_custom_call.1} parent=11 // pred_check
          %p332 = pneg %p57
        $region14: #{tpu_custom_call.1} parent=11 // pred_check_branch
          %334 = sbr.rel (%p332) target = $region16
        $region15: #{tpu_custom_call.1} parent=11 // pred_region
          %s335 = smul.u32 2, %s28
          %s337 = ssub.s32 256, 256
          %338 = vsyncadd [#allocation4], %s337
          %s339 = smul.addr %s335, 128
          %s340 = scalar_lea.hbm %s0, %s339
          %s341 = sshll.u32 [#allocation3], 4
          %s342 = int_to_ptr.vmem [resolvable:$true] %s341
          %347 = dma.hbm_to_vmem [thread:$0]  %s340, 256, %s342, [#allocation4], 128, 128, 8
        $region16: #{tpu_custom_call.1} parent=11 // pred_fallthru
          _
        // Predicated region
        $region17: #{tpu_custom_call.1} parent=11 // pred_check
          %p348 = pneg %p83
        $region18: #{tpu_custom_call.1} parent=11 // pred_check_branch
          %350 = sbr.rel (%p348) target = $region20
        $region19: #{tpu_custom_call.1} parent=11 // pred_region
          %s351 = smul.u32 2, %s28
          %s353 = ssub.s32 256, 256
          %354 = vsyncadd [#allocation7], %s353
          %s355 = smul.addr %s351, 128
          %s356 = scalar_lea.hbm %s1, %s355
          %s357 = sshll.u32 [#allocation6], 4
          %s358 = int_to_ptr.vmem [resolvable:$true] %s357
          %363 = dma.hbm_to_vmem [thread:$0]  %s356, 256, %s358, [#allocation7], 128, 128, 8
        $region20: #{tpu_custom_call.1} parent=11 // pred_fallthru
          _
      $region12: #{tpu_custom_call.1} parent=5 // pred_fallthru
        _
      %p364 = scmp.lt.s32.totalorder %s19, 2
      // Predicated region
      $region21: #{tpu_custom_call.1} parent=5 // pred_check
        %p365 = pneg %p364
      $region22: #{tpu_custom_call.1} parent=5 // pred_check_branch
        %367 = sbr.rel (%p365) target = $region24
      $region23: #{tpu_custom_call.1} parent=5 // pred_region
        // Predicated region
        $region25: #{tpu_custom_call.1} parent=23 // pred_check
          %p368 = pneg %p103
        $region26: #{tpu_custom_call.1} parent=23 // pred_check_branch
          %370 = sbr.rel (%p368) target = $region28
        $region27: #{tpu_custom_call.1} parent=23 // pred_region
          %s371 = sand.u32 %s19, 1
          %s372 = scalar_lea.sflag [#allocation4], %s371
          %s373 = sand.u32 %s93, 1
          %s374 = smul.addr %s373, 32
          %s375 = scalar_lea.vmem [#allocation8], %s374
          %s377 = ssub.s32 512, 512
          %378 = vsyncadd %s372, %s377
          %s379 = smul.addr %s27, 4
          %s380 = smul.addr %s379, 128
          %s381 = scalar_lea.hbm %s2, %s380
          %s382 = sshll.u32 %s375, 4
          %s383 = int_to_ptr.vmem [resolvable:$true] %s382
          %388 = dma.hbm_to_vmem [thread:$0]  %s381, 512, %s383, %s372, 128, 128, 8
        $region28: #{tpu_custom_call.1} parent=23 // pred_fallthru
          _
        // Predicated region
        $region29: #{tpu_custom_call.1} parent=23 // pred_check
          %p389 = pneg %p129
        $region30: #{tpu_custom_call.1} parent=23 // pred_check_branch
          %391 = sbr.rel (%p389) target = $region32
        $region31: #{tpu_custom_call.1} parent=23 // pred_region
          %p392 = scmp.lt.s32.totalorder %s27, 1
          %s393 = scalar_select %p392, %s27, 1
          %s394 = scalar_lea.vmem %s3, %s393
        $region32: #{tpu_custom_call.1} parent=23 // pred_fallthru
          _
        // Predicated region
        $region33: #{tpu_custom_call.1} parent=23 // pred_check
          %p395 = pneg %p155
        $region34: #{tpu_custom_call.1} parent=23 // pred_check_branch
          %397 = sbr.rel (%p395) target = $region36
        $region35: #{tpu_custom_call.1} parent=23 // pred_region
          %s398 = sand.u32 %s19, 1
          %s399 = scalar_lea.sflag [#allocation4], %s398
          %s400 = sand.u32 %s145, 1
          %s401 = smul.addr %s400, 32
          %s402 = scalar_lea.vmem [#allocation9], %s401
          %s404 = ssub.s32 512, 512
          %405 = vsyncadd %s399, %s404
          %s406 = smul.addr %s27, 4
          %s407 = smul.addr %s406, 128
          %s408 = scalar_lea.hbm %s4, %s407
          %s409 = sshll.u32 %s402, 4
          %s410 = int_to_ptr.vmem [resolvable:$true] %s409
          %415 = dma.hbm_to_vmem [thread:$0]  %s408, 512, %s410, %s399, 128, 128, 8
        $region36: #{tpu_custom_call.1} parent=23 // pred_fallthru
          _
        // Predicated region
        $region37: #{tpu_custom_call.1} parent=23 // pred_check
          %p416 = pneg %p181
        $region38: #{tpu_custom_call.1} parent=23 // pred_check_branch
          %418 = sbr.rel (%p416) target = $region40
        $region39: #{tpu_custom_call.1} parent=23 // pred_region
          %p419 = scmp.lt.s32.totalorder %s27, 1
          %s420 = scalar_select %p419, %s27, 1
          %s421 = scalar_lea.vmem %s5, %s420
        $region40: #{tpu_custom_call.1} parent=23 // pred_fallthru
          _
        // Predicated region
        $region41: #{tpu_custom_call.1} parent=23 // pred_check
          %p422 = pneg %p207
        $region42: #{tpu_custom_call.1} parent=23 // pred_check_branch
          %424 = sbr.rel (%p422) target = $region44
        $region43: #{tpu_custom_call.1} parent=23 // pred_region
          %s425 = sand.u32 %s19, 1
          %s426 = scalar_lea.sflag [#allocation4], %s425
          %s427 = sand.u32 %s197, 1
          %s428 = smul.addr %s427, 32
          %s429 = scalar_lea.vmem [#allocation10], %s428
          %s431 = ssub.s32 512, 512
          %432 = vsyncadd %s426, %s431
          %s433 = smul.addr %s27, 4
          %s434 = smul.addr %s433, 128
          %s435 = scalar_lea.hbm %s6, %s434
          %s436 = sshll.u32 %s429, 4
          %s437 = int_to_ptr.vmem [resolvable:$true] %s436
          %442 = dma.hbm_to_vmem [thread:$0]  %s435, 512, %s437, %s426, 128, 128, 8
        $region44: #{tpu_custom_call.1} parent=23 // pred_fallthru
          _
        // Predicated region
        $region45: #{tpu_custom_call.1} parent=23 // pred_check
          %p443 = pneg %p233
        $region46: #{tpu_custom_call.1} parent=23 // pred_check_branch
          %445 = sbr.rel (%p443) target = $region48
        $region47: #{tpu_custom_call.1} parent=23 // pred_region
          %p446 = scmp.lt.s32.totalorder %s27, 1
          %s447 = scalar_select %p446, %s27, 1
          %s448 = scalar_lea.vmem %s7, %s447
        $region48: #{tpu_custom_call.1} parent=23 // pred_fallthru
          _
        // Predicated region
        $region49: #{tpu_custom_call.1} parent=23 // pred_check
          %p449 = pneg %p259
        $region50: #{tpu_custom_call.1} parent=23 // pred_check_branch
          %451 = sbr.rel (%p449) target = $region52
        $region51: #{tpu_custom_call.1} parent=23 // pred_region
          %p452 = scmp.lt.s32.totalorder %s27, 1
          %s453 = scalar_select %p452, %s27, 1
          %s454 = scalar_lea.vmem %s8, %s453
        $region52: #{tpu_custom_call.1} parent=23 // pred_fallthru
          _
        // Predicated region
        $region53: #{tpu_custom_call.1} parent=23 // pred_check
          %p455 = pneg %p285
        $region54: #{tpu_custom_call.1} parent=23 // pred_check_branch
          %457 = sbr.rel (%p455) target = $region56
        $region55: #{tpu_custom_call.1} parent=23 // pred_region
          %p458 = scmp.lt.s32.totalorder %s27, 1
          %s459 = scalar_select %p458, %s27, 1
          %s460 = scalar_lea.vmem %s9, %s459
        $region56: #{tpu_custom_call.1} parent=23 // pred_fallthru
          _
      $region24: #{tpu_custom_call.1} parent=5 // pred_fallthru
        _
      %p461 = scmp.le.s32.totalorder 1, %s19
      %p462 = scmp.lt.s32.totalorder %s19, 3
      %p463 = pnand %p461, %p462
      %p464 = pneg %p463
      // Predicated region
      $region57: #{tpu_custom_call.1} parent=5 // pred_check
        _
      $region58: #{tpu_custom_call.1} parent=5 // pred_check_branch
        %466 = sbr.rel (%p463) target = $region60
      $region59: #{tpu_custom_call.1} parent=5 // pred_region
        %s467 = ssub.s32 %s19, 1
        // Predicated region
        $region61: #{tpu_custom_call.1} parent=59 // pred_check
          %p468 = pneg %p57
        $region62: #{tpu_custom_call.1} parent=59 // pred_check_branch
          %470 = sbr.rel (%p468) target = $region64
        $region63: #{tpu_custom_call.1} parent=59 // pred_region
          %471 = dma.done [#allocation4], 256
        $region64: #{tpu_custom_call.1} parent=59 // pred_fallthru
          _
        // Predicated region
        $region65: #{tpu_custom_call.1} parent=59 // pred_check
          %p472 = pneg %p83
        $region66: #{tpu_custom_call.1} parent=59 // pred_check_branch
          %474 = sbr.rel (%p472) target = $region68
        $region67: #{tpu_custom_call.1} parent=59 // pred_region
          %475 = dma.done [#allocation7], 256
        $region68: #{tpu_custom_call.1} parent=59 // pred_fallthru
          _
        %s476 = sand.u32 %s24, 1
        %s477 = scalar_lea.sflag [#allocation4], %s476
        %s478 = sand.u32 %s96, 1
        %s479 = smul.addr %s478, 32
        %s480 = scalar_lea.vmem [#allocation8], %s479
        // Predicated region
        $region69: #{tpu_custom_call.1} parent=59 // pred_check
          %p481 = pneg %p109
        $region70: #{tpu_custom_call.1} parent=59 // pred_check_branch
          %483 = sbr.rel (%p481) target = $region72
        $region71: #{tpu_custom_call.1} parent=59 // pred_region
          %484 = dma.done %s477, 512
        $region72: #{tpu_custom_call.1} parent=59 // pred_fallthru
          _
        %s485 = sand.u32 %s24, 1
        %s486 = scalar_lea.sflag [#allocation4], %s485
        %s487 = sand.u32 %s148, 1
        %s488 = smul.addr %s487, 32
        %s489 = scalar_lea.vmem [#allocation9], %s488
        // Predicated region
        $region73: #{tpu_custom_call.1} parent=59 // pred_check
          %p490 = pneg %p161
        $region74: #{tpu_custom_call.1} parent=59 // pred_check_branch
          %492 = sbr.rel (%p490) target = $region76
        $region75: #{tpu_custom_call.1} parent=59 // pred_region
          %493 = dma.done %s486, 512
        $region76: #{tpu_custom_call.1} parent=59 // pred_fallthru
          _
        %s494 = sand.u32 %s24, 1
        %s495 = scalar_lea.sflag [#allocation4], %s494
        %s496 = sand.u32 %s200, 1
        %s497 = smul.addr %s496, 32
        %s498 = scalar_lea.vmem [#allocation10], %s497
        // Predicated region
        $region77: #{tpu_custom_call.1} parent=59 // pred_check
          %p499 = pneg %p213
        $region78: #{tpu_custom_call.1} parent=59 // pred_check_branch
          %501 = sbr.rel (%p499) target = $region80
        $region79: #{tpu_custom_call.1} parent=59 // pred_region
          %502 = dma.done %s495, 512
        $region80: #{tpu_custom_call.1} parent=59 // pred_fallthru
          _
        %p503 = pneg %p57
        %p504 = pneg %p54
        %p505 = pneg %p83
        %p506 = pneg %p80
        %s507 = sand.u32 %s24, 1
        %s508 = scalar_lea.sflag [#allocation4], %s507
        %s509 = sand.u32 %s96, 1
        %s510 = smul.addr %s509, 32
        %s511 = scalar_lea.vmem [#allocation8], %s510
        %p512 = pneg %p109
        %p513 = pneg %p106
        %p514 = scmp.lt.s32.totalorder %s29, 1
        %s515 = scalar_select %p514, %s29, 1
        %s516 = scalar_lea.vmem %s3, %s515
        %p517 = pneg %p135
        %p518 = pneg %p132
        %s519 = sand.u32 %s24, 1
        %s520 = scalar_lea.sflag [#allocation4], %s519
        %s521 = sand.u32 %s148, 1
        %s522 = smul.addr %s521, 32
        %s523 = scalar_lea.vmem [#allocation9], %s522
        %p524 = pneg %p161
        %p525 = pneg %p158
        %p526 = scmp.lt.s32.totalorder %s29, 1
        %s527 = scalar_select %p526, %s29, 1
        %s528 = scalar_lea.vmem %s5, %s527
        %p529 = pneg %p187
        %p530 = pneg %p184
        %s531 = sand.u32 %s24, 1
        %s532 = scalar_lea.sflag [#allocation4], %s531
        %s533 = sand.u32 %s200, 1
        %s534 = smul.addr %s533, 32
        %s535 = scalar_lea.vmem [#allocation10], %s534
        %p536 = pneg %p213
        %p537 = pneg %p210
        %p538 = scmp.lt.s32.totalorder %s29, 1
        %s539 = scalar_select %p538, %s29, 1
        %s540 = scalar_lea.vmem %s7, %s539
        %p541 = pneg %p239
        %p542 = pneg %p236
        %p543 = scmp.lt.s32.totalorder %s29, 1
        %s544 = scalar_select %p543, %s29, 1
        %s545 = scalar_lea.vmem %s8, %s544
        %p546 = pneg %p265
        %p547 = pneg %p262
        %p548 = scmp.lt.s32.totalorder %s29, 1
        %s549 = scalar_select %p548, %s29, 1
        %s550 = scalar_lea.vmem %s9, %s549
        %p551 = pneg %p291
        %p552 = pneg %p288
        %p553 = pneg %p317
        %p554 = pneg %p314
        %s555 = smul.u32 2, %s28
        %s556 = smul.u32 2, %s28
        %p557 = scmp.lt.s32.totalorder %s29, 1
        %s558 = scalar_select %p557, %s29, 1
        %s559 = scalar_lea.vmem %s3, %s558
        %p560 = scmp.lt.s32.totalorder %s29, 1
        %s561 = scalar_select %p560, %s29, 1
        %s562 = scalar_lea.vmem %s5, %s561
        %p563 = scmp.lt.s32.totalorder %s29, 1
        %s564 = scalar_select %p563, %s29, 1
        %s565 = scalar_lea.vmem %s7, %s564
        %p566 = scmp.lt.s32.totalorder %s29, 1
        %s567 = scalar_select %p566, %s29, 1
        %s568 = scalar_lea.vmem %s8, %s567
        %p569 = scmp.lt.s32.totalorder %s29, 1
        %s570 = scalar_select %p569, %s29, 1
        %s571 = scalar_lea.vmem %s9, %s570
        %s572 = smul.u32 2, %s28
        %p573 = scmp.eq.s32.totalorder %s29, 0
        // Predicated region
        $region81: #{tpu_custom_call.1} parent=59 // pred_check
          %p574 = pneg %p573
        $region82: #{tpu_custom_call.1} parent=59 // pred_check_branch
          %576 = sbr.rel (%p574) target = $region84
        $region83: #{tpu_custom_call.1} parent=59 // pred_region
          %v577 = vld [vmem:[#allocation3] sm:$0xff]
          %v578 = vld [vmem:[#allocation3 + $0x8] sm:$0xff]
          %vm579 = vcmask 261120
          %580 = vst.msk [vmem:[#allocation2] sm:$0xff] %vm579, %v577
          %581 = vst.msk [vmem:[#allocation2 + $0x8] sm:$0xff] %vm579, %v578
        $region84: #{tpu_custom_call.1} parent=59 // pred_fallthru
          _
        %v582 = vld [vmem:[#allocation2] sm:$0xff]
        %v583 = vld [vmem:[#allocation2 + $0x8] sm:$0xff]
        %v584 = vld [vmem:[#allocation6] sm:$0xff]
        %v585 = vld [vmem:[#allocation6 + $0x8] sm:$0xff]
        %v586 = vld [vmem:[%s480] sm:$0xff]
        %v587 = vld [vmem:[%s480 + $0x8] sm:$0xff]
        %v588 = vld [vmem:[%s480 + $0x10] sm:$0xff]
        %v589 = vld [vmem:[%s480 + $0x18] sm:$0xff]
        %v590 = vld [vmem:[%s559] sm:$0x1]
        %v592 = vlaneseq
        %v593 = vshrl.u32 %v592, 7
        %v594 = vsub.s32 0, %v593
        %v595 = vrot.slane %v590, %v594
        %vm597 = vcmask 261120
        %v599 = vsel %vm597, %v582, 0
        %v602 = vsel %vm597, %v583, 0
        %604 = vmatprep.subr.mxu0 0.0
        %605 = vmatpush1.msra.mxu0 0.0
        %606 = vmatprep.subr.mxu0 0.0
        %607 = vmatpush1.msra.mxu0 0.0
        %608 = vmatprep.subr.mxu0 0.0
        %609 = vmatpush1.msra.mxu0 0.0
        %610 = vmatprep.subr.mxu0 0.0
        %611 = vmatpush1.msra.mxu0 0.0
        %612 = vmatprep.subr.mxu0 0.0
        %613 = vmatpush1.msra.mxu0 0.0
        %614 = vmatprep.subr.mxu0 0.0
        %615 = vmatpush1.msra.mxu0 0.0
        %616 = vmatprep.subr.mxu0 0.0
        %617 = vmatpush1.msra.mxu0 0.0
        %618 = vmatprep.subr.mxu0 0.0
        %619 = vmatpush1.msra.mxu0 0.0
        %620 = vmatprep.subr.mxu0 0.0
        %621 = vmatpush1.msra.mxu0 0.0
        %622 = vmatprep.subr.mxu0 0.0
        %623 = vmatpush1.msra.mxu0 0.0
        %624 = vmatprep.subr.mxu0 0.0
        %625 = vmatpush1.msra.mxu0 0.0
        %626 = vmatprep.subr.mxu0 0.0
        %627 = vmatpush1.msra.mxu0 0.0
        %628 = vmatprep.subr.mxu0 0.0
        %629 = vmatpush1.msra.mxu0 %v589
        %630 = vmatprep.subr.mxu0 0.0
        %631 = vmatpush1.msra.mxu0 %v588
        %632 = vmatprep.subr.mxu0 0.0
        %633 = vmatpush1.msra.mxu0 %v587
        %634 = vmatprep.subr.mxu0 0.0
        %635 = vmatpush1.msra.mxu0 %v586
        %636 = vmatprep.subr.mxu0 0.0
        %637 = vmatpush2.msra.mxu0 0.0
        %638 = vmatprep.subr.mxu0 0.0
        %639 = vmatpush2.msra.mxu0 0.0
        %640 = vmatprep.subr.mxu0 0.0
        %641 = vmatpush2.msra.mxu0 0.0
        %642 = vmatprep.subr.mxu0 0.0
        %643 = vmatpush2.msra.mxu0 0.0
        %644 = vmatprep.subr.mxu0 0.0
        %645 = vmatpush2.msra.mxu0 0.0
        %646 = vmatprep.subr.mxu0 0.0
        %647 = vmatpush2.msra.mxu0 0.0
        %648 = vmatprep.subr.mxu0 0.0
        %649 = vmatpush2.msra.mxu0 0.0
        %650 = vmatprep.subr.mxu0 0.0
        %651 = vmatpush2.msra.mxu0 0.0
        %652 = vmatprep.subr.mxu0 0.0
        %653 = vmatpush2.msra.mxu0 0.0
        %654 = vmatprep.subr.mxu0 0.0
        %655 = vmatpush2.msra.mxu0 0.0
        %656 = vmatprep.subr.mxu0 0.0
        %657 = vmatpush2.msra.mxu0 0.0
        %658 = vmatprep.subr.mxu0 0.0
        %659 = vmatpush2.msra.mxu0 0.0
        %660 = vmatprep.subr.mxu0 0.0
        %661 = vmatpush2.msra.mxu0 0.0
        %662 = vmatprep.subr.mxu0 0.0
        %663 = vmatpush2.msra.mxu0 0.0
        %664 = vmatprep.subr.mxu0 0.0
        %665 = vmatpush2.msra.mxu0 0.0
        %666 = vmatprep.subr.mxu0 0.0
        %667 = vmatpush2.msra.mxu0 0.0
        %668 = vmatprep.mubr.f32.mxu0 0.0
        %669 = vmatmul.mubr.f32.gmra.mxu0 %v599
        %v670 = vpop.f32.mrf.mxu0
        %v671 = vadd.f32 %v595, %v670
        %v672 = vpop.f32.mrf.mxu0
        %673 = vmatprep.mubr.f32.mxu0 0.0
        %674 = vmatmul.mubr.f32.gmra.mxu0 %v602
        %v675 = vpop.f32.mrf.mxu0
        %v676 = vadd.f32 %v595, %v675
        %v677 = vpop.f32.mrf.mxu0
        %678 = vdwg.mxu0
        %v679 = vld [vmem:[%s489] sm:$0xff]
        %v680 = vld [vmem:[%s489 + $0x8] sm:$0xff]
        %v681 = vld [vmem:[%s489 + $0x10] sm:$0xff]
        %v682 = vld [vmem:[%s489 + $0x18] sm:$0xff]
        %v683 = vld [vmem:[%s562] sm:$0x1]
        %v685 = vlaneseq
        %v686 = vshrl.u32 %v685, 7
        %v687 = vsub.s32 0, %v686
        %v688 = vrot.slane %v683, %v687
        %v691 = vsel %vm597, %v584, 0
        %v694 = vsel %vm597, %v585, 0
        %696 = vmatprep.subr.mxu0 0.0
        %697 = vmatpush1.msra.mxu0 0.0
        %698 = vmatprep.subr.mxu0 0.0
        %699 = vmatpush1.msra.mxu0 0.0
        %700 = vmatprep.subr.mxu0 0.0
        %701 = vmatpush1.msra.mxu0 0.0
        %702 = vmatprep.subr.mxu0 0.0
        %703 = vmatpush1.msra.mxu0 0.0
        %704 = vmatprep.subr.mxu0 0.0
        %705 = vmatpush1.msra.mxu0 0.0
        %706 = vmatprep.subr.mxu0 0.0
        %707 = vmatpush1.msra.mxu0 0.0
        %708 = vmatprep.subr.mxu0 0.0
        %709 = vmatpush1.msra.mxu0 0.0
        %710 = vmatprep.subr.mxu0 0.0
        %711 = vmatpush1.msra.mxu0 0.0
        %712 = vmatprep.subr.mxu0 0.0
        %713 = vmatpush1.msra.mxu0 0.0
        %714 = vmatprep.subr.mxu0 0.0
        %715 = vmatpush1.msra.mxu0 0.0
        %716 = vmatprep.subr.mxu0 0.0
        %717 = vmatpush1.msra.mxu0 0.0
        %718 = vmatprep.subr.mxu0 0.0
        %719 = vmatpush1.msra.mxu0 0.0
        %720 = vmatprep.subr.mxu0 0.0
        %721 = vmatpush1.msra.mxu0 %v682
        %722 = vmatprep.subr.mxu0 0.0
        %723 = vmatpush1.msra.mxu0 %v681
        %724 = vmatprep.subr.mxu0 0.0
        %725 = vmatpush1.msra.mxu0 %v680
        %726 = vmatprep.subr.mxu0 0.0
        %727 = vmatpush1.msra.mxu0 %v679
        %728 = vmatprep.subr.mxu0 0.0
        %729 = vmatpush2.msra.mxu0 0.0
        %730 = vmatprep.subr.mxu0 0.0
        %731 = vmatpush2.msra.mxu0 0.0
        %732 = vmatprep.subr.mxu0 0.0
        %733 = vmatpush2.msra.mxu0 0.0
        %734 = vmatprep.subr.mxu0 0.0
        %735 = vmatpush2.msra.mxu0 0.0
        %736 = vmatprep.subr.mxu0 0.0
        %737 = vmatpush2.msra.mxu0 0.0
        %738 = vmatprep.subr.mxu0 0.0
        %739 = vmatpush2.msra.mxu0 0.0
        %740 = vmatprep.subr.mxu0 0.0
        %741 = vmatpush2.msra.mxu0 0.0
        %742 = vmatprep.subr.mxu0 0.0
        %743 = vmatpush2.msra.mxu0 0.0
        %744 = vmatprep.subr.mxu0 0.0
        %745 = vmatpush2.msra.mxu0 0.0
        %746 = vmatprep.subr.mxu0 0.0
        %747 = vmatpush2.msra.mxu0 0.0
        %748 = vmatprep.subr.mxu0 0.0
        %749 = vmatpush2.msra.mxu0 0.0
        %750 = vmatprep.subr.mxu0 0.0
        %751 = vmatpush2.msra.mxu0 0.0
        %752 = vmatprep.subr.mxu0 0.0
        %753 = vmatpush2.msra.mxu0 0.0
        %754 = vmatprep.subr.mxu0 0.0
        %755 = vmatpush2.msra.mxu0 0.0
        %756 = vmatprep.subr.mxu0 0.0
        %757 = vmatpush2.msra.mxu0 0.0
        %758 = vmatprep.subr.mxu0 0.0
        %759 = vmatpush2.msra.mxu0 0.0
        %760 = vmatprep.mubr.f32.mxu0 0.0
        %761 = vmatmul.mubr.f32.gmra.mxu0 %v691
        %v762 = vpop.f32.mrf.mxu0
        %v763 = vadd.f32 %v688, %v762
        %v764 = vpop.f32.mrf.mxu0
        %765 = vmatprep.mubr.f32.mxu0 0.0
        %766 = vmatmul.mubr.f32.gmra.mxu0 %v694
        %v767 = vpop.f32.mrf.mxu0
        %v768 = vadd.f32 %v688, %v767
        %v769 = vpop.f32.mrf.mxu0
        %770 = vdwg.mxu0
        %v772 = vsel %vm597, %v671, 0
        %v775 = vsel %vm597, %v763, 0
        %777 = vmatprep.subr.mxu0 0.0
        %778 = vmatpush1.xpose.msra.mxu0 0.0
        %779 = vmatprep.subr.mxu0 0.0
        %780 = vmatpush1.xpose.msra.mxu0 0.0
        %781 = vmatprep.subr.mxu0 0.0
        %782 = vmatpush1.xpose.msra.mxu0 0.0
        %783 = vmatprep.subr.mxu0 0.0
        %784 = vmatpush1.xpose.msra.mxu0 0.0
        %785 = vmatprep.subr.mxu0 0.0
        %786 = vmatpush1.xpose.msra.mxu0 0.0
        %787 = vmatprep.subr.mxu0 0.0
        %788 = vmatpush1.xpose.msra.mxu0 0.0
        %789 = vmatprep.subr.mxu0 0.0
        %790 = vmatpush1.xpose.msra.mxu0 0.0
        %791 = vmatprep.subr.mxu0 0.0
        %792 = vmatpush1.xpose.msra.mxu0 0.0
        %793 = vmatprep.subr.mxu0 0.0
        %794 = vmatpush1.xpose.msra.mxu0 0.0
        %795 = vmatprep.subr.mxu0 0.0
        %796 = vmatpush1.xpose.msra.mxu0 0.0
        %797 = vmatprep.subr.mxu0 0.0
        %798 = vmatpush1.xpose.msra.mxu0 0.0
        %799 = vmatprep.subr.mxu0 0.0
        %800 = vmatpush1.xpose.msra.mxu0 0.0
        %801 = vmatprep.subr.mxu0 0.0
        %802 = vmatpush1.xpose.msra.mxu0 0.0
        %803 = vmatprep.subr.mxu0 0.0
        %804 = vmatpush1.xpose.msra.mxu0 0.0
        %805 = vmatprep.subr.mxu0 0.0
        %806 = vmatpush1.xpose.msra.mxu0 0.0
        %807 = vmatprep.subr.mxu0 0.0
        %808 = vmatpush1.xpose.msra.mxu0 %v775
        %809 = vmatprep.subr.mxu0 0.0
        %810 = vmatpush2.xpose.msra.mxu0 0.0
        %811 = vmatprep.subr.mxu0 0.0
        %812 = vmatpush2.xpose.msra.mxu0 0.0
        %813 = vmatprep.subr.mxu0 0.0
        %814 = vmatpush2.xpose.msra.mxu0 0.0
        %815 = vmatprep.subr.mxu0 0.0
        %816 = vmatpush2.xpose.msra.mxu0 0.0
        %817 = vmatprep.subr.mxu0 0.0
        %818 = vmatpush2.xpose.msra.mxu0 0.0
        %819 = vmatprep.subr.mxu0 0.0
        %820 = vmatpush2.xpose.msra.mxu0 0.0
        %821 = vmatprep.subr.mxu0 0.0
        %822 = vmatpush2.xpose.msra.mxu0 0.0
        %823 = vmatprep.subr.mxu0 0.0
        %824 = vmatpush2.xpose.msra.mxu0 0.0
        %825 = vmatprep.subr.mxu0 0.0
        %826 = vmatpush2.xpose.msra.mxu0 0.0
        %827 = vmatprep.subr.mxu0 0.0
        %828 = vmatpush2.xpose.msra.mxu0 0.0
        %829 = vmatprep.subr.mxu0 0.0
        %830 = vmatpush2.xpose.msra.mxu0 0.0
        %831 = vmatprep.subr.mxu0 0.0
        %832 = vmatpush2.xpose.msra.mxu0 0.0
        %833 = vmatprep.subr.mxu0 0.0
        %834 = vmatpush2.xpose.msra.mxu0 0.0
        %835 = vmatprep.subr.mxu0 0.0
        %836 = vmatpush2.xpose.msra.mxu0 0.0
        %837 = vmatprep.subr.mxu0 0.0
        %838 = vmatpush2.xpose.msra.mxu0 0.0
        %839 = vmatprep.subr.mxu0 0.0
        %840 = vmatpush2.xpose.msra.mxu0 0.0
        %841 = vmatprep.mubr.f32.mxu0 0.0
        %842 = vmatmul.mubr.f32.gmra.mxu0 %v772
        %v843 = vpop.f32.mrf.mxu0
        %v844 = vadd.f32 0.0, %v843
        %v845 = vpop.f32.mrf.mxu0
        %846 = vdwg.mxu0
        %v848 = vsel %vm597, %v676, 0
        %v851 = vsel %vm597, %v768, 0
        %853 = vmatprep.subr.mxu0 0.0
        %854 = vmatpush1.xpose.msra.mxu0 0.0
        %855 = vmatprep.subr.mxu0 0.0
        %856 = vmatpush1.xpose.msra.mxu0 0.0
        %857 = vmatprep.subr.mxu0 0.0
        %858 = vmatpush1.xpose.msra.mxu0 0.0
        %859 = vmatprep.subr.mxu0 0.0
        %860 = vmatpush1.xpose.msra.mxu0 0.0
        %861 = vmatprep.subr.mxu0 0.0
        %862 = vmatpush1.xpose.msra.mxu0 0.0
        %863 = vmatprep.subr.mxu0 0.0
        %864 = vmatpush1.xpose.msra.mxu0 0.0
        %865 = vmatprep.subr.mxu0 0.0
        %866 = vmatpush1.xpose.msra.mxu0 0.0
        %867 = vmatprep.subr.mxu0 0.0
        %868 = vmatpush1.xpose.msra.mxu0 0.0
        %869 = vmatprep.subr.mxu0 0.0
        %870 = vmatpush1.xpose.msra.mxu0 0.0
        %871 = vmatprep.subr.mxu0 0.0
        %872 = vmatpush1.xpose.msra.mxu0 0.0
        %873 = vmatprep.subr.mxu0 0.0
        %874 = vmatpush1.xpose.msra.mxu0 0.0
        %875 = vmatprep.subr.mxu0 0.0
        %876 = vmatpush1.xpose.msra.mxu0 0.0
        %877 = vmatprep.subr.mxu0 0.0
        %878 = vmatpush1.xpose.msra.mxu0 0.0
        %879 = vmatprep.subr.mxu0 0.0
        %880 = vmatpush1.xpose.msra.mxu0 0.0
        %881 = vmatprep.subr.mxu0 0.0
        %882 = vmatpush1.xpose.msra.mxu0 0.0
        %883 = vmatprep.subr.mxu0 0.0
        %884 = vmatpush1.xpose.msra.mxu0 %v851
        %885 = vmatprep.subr.mxu0 0.0
        %886 = vmatpush2.xpose.msra.mxu0 0.0
        %887 = vmatprep.subr.mxu0 0.0
        %888 = vmatpush2.xpose.msra.mxu0 0.0
        %889 = vmatprep.subr.mxu0 0.0
        %890 = vmatpush2.xpose.msra.mxu0 0.0
        %891 = vmatprep.subr.mxu0 0.0
        %892 = vmatpush2.xpose.msra.mxu0 0.0
        %893 = vmatprep.subr.mxu0 0.0
        %894 = vmatpush2.xpose.msra.mxu0 0.0
        %895 = vmatprep.subr.mxu0 0.0
        %896 = vmatpush2.xpose.msra.mxu0 0.0
        %897 = vmatprep.subr.mxu0 0.0
        %898 = vmatpush2.xpose.msra.mxu0 0.0
        %899 = vmatprep.subr.mxu0 0.0
        %900 = vmatpush2.xpose.msra.mxu0 0.0
        %901 = vmatprep.subr.mxu0 0.0
        %902 = vmatpush2.xpose.msra.mxu0 0.0
        %903 = vmatprep.subr.mxu0 0.0
        %904 = vmatpush2.xpose.msra.mxu0 0.0
        %905 = vmatprep.subr.mxu0 0.0
        %906 = vmatpush2.xpose.msra.mxu0 0.0
        %907 = vmatprep.subr.mxu0 0.0
        %908 = vmatpush2.xpose.msra.mxu0 0.0
        %909 = vmatprep.subr.mxu0 0.0
        %910 = vmatpush2.xpose.msra.mxu0 0.0
        %911 = vmatprep.subr.mxu0 0.0
        %912 = vmatpush2.xpose.msra.mxu0 0.0
        %913 = vmatprep.subr.mxu0 0.0
        %914 = vmatpush2.xpose.msra.mxu0 0.0
        %915 = vmatprep.subr.mxu0 0.0
        %916 = vmatpush2.xpose.msra.mxu0 0.0
        %917 = vmatprep.mubr.f32.mxu0 0.0
        %918 = vmatmul.mubr.f32.gmra.mxu0 %v848
        %v919 = vpop.f32.mrf.mxu0
        %v920 = vadd.f32 0.0, %v919
        %v921 = vpop.f32.mrf.mxu0
        %922 = vdwg.mxu0
        %v923 = vmul.f32 %v844, 0.17677669
        %v924 = vmul.f32 %v920, 0.17677669
        %vm925 = vcmask 64512
        %v927 = vsel %vm925, %v923, 0
        %929 = vmatprep.subr.mxu0 0.0
        %930 = vmatpush1.msra.mxu0 0.0
        %931 = vmatprep.subr.mxu0 0.0
        %932 = vmatpush1.msra.mxu0 0.0
        %933 = vmatprep.subr.mxu0 0.0
        %934 = vmatpush1.msra.mxu0 0.0
        %935 = vmatprep.subr.mxu0 0.0
        %936 = vmatpush1.msra.mxu0 0.0
        %937 = vmatprep.subr.mxu0 0.0
        %938 = vmatpush1.msra.mxu0 0.0
        %939 = vmatprep.subr.mxu0 0.0
        %940 = vmatpush1.msra.mxu0 0.0
        %941 = vmatprep.subr.mxu0 0.0
        %942 = vmatpush1.msra.mxu0 0.0
        %943 = vmatprep.subr.mxu0 0.0
        %944 = vmatpush1.msra.mxu0 0.0
        %945 = vmatprep.subr.mxu0 0.0
        %946 = vmatpush1.msra.mxu0 0.0
        %947 = vmatprep.subr.mxu0 0.0
        %948 = vmatpush1.msra.mxu0 0.0
        %949 = vmatprep.subr.mxu0 0.0
        %950 = vmatpush1.msra.mxu0 0.0
        %951 = vmatprep.subr.mxu0 0.0
        %952 = vmatpush1.msra.mxu0 0.0
        %953 = vmatprep.subr.mxu0 0.0
        %954 = vmatpush1.msra.mxu0 0.0
        %955 = vmatprep.subr.mxu0 0.0
        %956 = vmatpush1.msra.mxu0 0.0
        %957 = vmatprep.subr.mxu0 0.0
        %958 = vmatpush1.msra.mxu0 0.0
        %959 = vmatprep.subr.mxu0 0.0
        %960 = vmatpush1.msra.mxu0 %v763
        %961 = vmatprep.subr.mxu0 0.0
        %962 = vmatpush2.msra.mxu0 0.0
        %963 = vmatprep.subr.mxu0 0.0
        %964 = vmatpush2.msra.mxu0 0.0
        %965 = vmatprep.subr.mxu0 0.0
        %966 = vmatpush2.msra.mxu0 0.0
        %967 = vmatprep.subr.mxu0 0.0
        %968 = vmatpush2.msra.mxu0 0.0
        %969 = vmatprep.subr.mxu0 0.0
        %970 = vmatpush2.msra.mxu0 0.0
        %971 = vmatprep.subr.mxu0 0.0
        %972 = vmatpush2.msra.mxu0 0.0
        %973 = vmatprep.subr.mxu0 0.0
        %974 = vmatpush2.msra.mxu0 0.0
        %975 = vmatprep.subr.mxu0 0.0
        %976 = vmatpush2.msra.mxu0 0.0
        %977 = vmatprep.subr.mxu0 0.0
        %978 = vmatpush2.msra.mxu0 0.0
        %979 = vmatprep.subr.mxu0 0.0
        %980 = vmatpush2.msra.mxu0 0.0
        %981 = vmatprep.subr.mxu0 0.0
        %982 = vmatpush2.msra.mxu0 0.0
        %983 = vmatprep.subr.mxu0 0.0
        %984 = vmatpush2.msra.mxu0 0.0
        %985 = vmatprep.subr.mxu0 0.0
        %986 = vmatpush2.msra.mxu0 0.0
        %987 = vmatprep.subr.mxu0 0.0
        %988 = vmatpush2.msra.mxu0 0.0
        %989 = vmatprep.subr.mxu0 0.0
        %990 = vmatpush2.msra.mxu0 0.0
        %991 = vmatprep.subr.mxu0 0.0
        %992 = vmatpush2.msra.mxu0 0.0
        %993 = vmatprep.mubr.f32.mxu0 0.0
        %994 = vmatmul.mubr.f32.gmra.mxu0 %v927
        %v995 = vpop.f32.mrf.mxu0
        %v996 = vadd.f32 0.0, %v995
        %v997 = vpop.f32.mrf.mxu0
        %998 = vdwg.mxu0
        %v1000 = vsel %vm925, %v924, 0
        %1002 = vmatprep.subr.mxu0 0.0
        %1003 = vmatpush1.msra.mxu0 0.0
        %1004 = vmatprep.subr.mxu0 0.0
        %1005 = vmatpush1.msra.mxu0 0.0
        %1006 = vmatprep.subr.mxu0 0.0
        %1007 = vmatpush1.msra.mxu0 0.0
        %1008 = vmatprep.subr.mxu0 0.0
        %1009 = vmatpush1.msra.mxu0 0.0
        %1010 = vmatprep.subr.mxu0 0.0
        %1011 = vmatpush1.msra.mxu0 0.0
        %1012 = vmatprep.subr.mxu0 0.0
        %1013 = vmatpush1.msra.mxu0 0.0
        %1014 = vmatprep.subr.mxu0 0.0
        %1015 = vmatpush1.msra.mxu0 0.0
        %1016 = vmatprep.subr.mxu0 0.0
        %1017 = vmatpush1.msra.mxu0 0.0
        %1018 = vmatprep.subr.mxu0 0.0
        %1019 = vmatpush1.msra.mxu0 0.0
        %1020 = vmatprep.subr.mxu0 0.0
        %1021 = vmatpush1.msra.mxu0 0.0
        %1022 = vmatprep.subr.mxu0 0.0
        %1023 = vmatpush1.msra.mxu0 0.0
        %1024 = vmatprep.subr.mxu0 0.0
        %1025 = vmatpush1.msra.mxu0 0.0
        %1026 = vmatprep.subr.mxu0 0.0
        %1027 = vmatpush1.msra.mxu0 0.0
        %1028 = vmatprep.subr.mxu0 0.0
        %1029 = vmatpush1.msra.mxu0 0.0
        %1030 = vmatprep.subr.mxu0 0.0
        %1031 = vmatpush1.msra.mxu0 0.0
        %1032 = vmatprep.subr.mxu0 0.0
        %1033 = vmatpush1.msra.mxu0 %v768
        %1034 = vmatprep.subr.mxu0 0.0
        %1035 = vmatpush2.msra.mxu0 0.0
        %1036 = vmatprep.subr.mxu0 0.0
        %1037 = vmatpush2.msra.mxu0 0.0
        %1038 = vmatprep.subr.mxu0 0.0
        %1039 = vmatpush2.msra.mxu0 0.0
        %1040 = vmatprep.subr.mxu0 0.0
        %1041 = vmatpush2.msra.mxu0 0.0
        %1042 = vmatprep.subr.mxu0 0.0
        %1043 = vmatpush2.msra.mxu0 0.0
        %1044 = vmatprep.subr.mxu0 0.0
        %1045 = vmatpush2.msra.mxu0 0.0
        %1046 = vmatprep.subr.mxu0 0.0
        %1047 = vmatpush2.msra.mxu0 0.0
        %1048 = vmatprep.subr.mxu0 0.0
        %1049 = vmatpush2.msra.mxu0 0.0
        %1050 = vmatprep.subr.mxu0 0.0
        %1051 = vmatpush2.msra.mxu0 0.0
        %1052 = vmatprep.subr.mxu0 0.0
        %1053 = vmatpush2.msra.mxu0 0.0
        %1054 = vmatprep.subr.mxu0 0.0
        %1055 = vmatpush2.msra.mxu0 0.0
        %1056 = vmatprep.subr.mxu0 0.0
        %1057 = vmatpush2.msra.mxu0 0.0
        %1058 = vmatprep.subr.mxu0 0.0
        %1059 = vmatpush2.msra.mxu0 0.0
        %1060 = vmatprep.subr.mxu0 0.0
        %1061 = vmatpush2.msra.mxu0 0.0
        %1062 = vmatprep.subr.mxu0 0.0
        %1063 = vmatpush2.msra.mxu0 0.0
        %1064 = vmatprep.subr.mxu0 0.0
        %1065 = vmatpush2.msra.mxu0 0.0
        %1066 = vmatprep.mubr.f32.mxu0 0.0
        %1067 = vmatmul.mubr.f32.gmra.mxu0 %v1000
        %v1068 = vpop.f32.mrf.mxu0
        %v1069 = vadd.f32 0.0, %v1068
        %v1070 = vpop.f32.mrf.mxu0
        %1071 = vdwg.mxu0
        %v1072 = vsub.f32 %v996, %v582
        %v1073 = vsub.f32 %v1069, %v583
        %v1074 = vld [vmem:[%s498] sm:$0xff]
        %v1075 = vld [vmem:[%s498 + $0x8] sm:$0xff]
        %v1076 = vld [vmem:[%s498 + $0x10] sm:$0xff]
        %v1077 = vld [vmem:[%s498 + $0x18] sm:$0xff]
        %v1078 = vld [vmem:[%s565] sm:$0x1]
        %v1080 = vlaneseq
        %v1081 = vshrl.u32 %v1080, 7
        %v1082 = vsub.s32 0, %v1081
        %v1083 = vrot.slane %v1078, %v1082
        %v1086 = vsel %vm597, %v1072, 0
        %v1089 = vsel %vm597, %v1073, 0
        %1091 = vmatprep.subr.mxu0 0.0
        %1092 = vmatpush1.msra.mxu0 0.0
        %1093 = vmatprep.subr.mxu0 0.0
        %1094 = vmatpush1.msra.mxu0 0.0
        %1095 = vmatprep.subr.mxu0 0.0
        %1096 = vmatpush1.msra.mxu0 0.0
        %1097 = vmatprep.subr.mxu0 0.0
        %1098 = vmatpush1.msra.mxu0 0.0
        %1099 = vmatprep.subr.mxu0 0.0
        %1100 = vmatpush1.msra.mxu0 0.0
        %1101 = vmatprep.subr.mxu0 0.0
        %1102 = vmatpush1.msra.mxu0 0.0
        %1103 = vmatprep.subr.mxu0 0.0
        %1104 = vmatpush1.msra.mxu0 0.0
        %1105 = vmatprep.subr.mxu0 0.0
        %1106 = vmatpush1.msra.mxu0 0.0
        %1107 = vmatprep.subr.mxu0 0.0
        %1108 = vmatpush1.msra.mxu0 0.0
        %1109 = vmatprep.subr.mxu0 0.0
        %1110 = vmatpush1.msra.mxu0 0.0
        %1111 = vmatprep.subr.mxu0 0.0
        %1112 = vmatpush1.msra.mxu0 0.0
        %1113 = vmatprep.subr.mxu0 0.0
        %1114 = vmatpush1.msra.mxu0 0.0
        %1115 = vmatprep.subr.mxu0 0.0
        %1116 = vmatpush1.msra.mxu0 %v1077
        %1117 = vmatprep.subr.mxu0 0.0
        %1118 = vmatpush1.msra.mxu0 %v1076
        %1119 = vmatprep.subr.mxu0 0.0
        %1120 = vmatpush1.msra.mxu0 %v1075
        %1121 = vmatprep.subr.mxu0 0.0
        %1122 = vmatpush1.msra.mxu0 %v1074
        %1123 = vmatprep.subr.mxu0 0.0
        %1124 = vmatpush2.msra.mxu0 0.0
        %1125 = vmatprep.subr.mxu0 0.0
        %1126 = vmatpush2.msra.mxu0 0.0
        %1127 = vmatprep.subr.mxu0 0.0
        %1128 = vmatpush2.msra.mxu0 0.0
        %1129 = vmatprep.subr.mxu0 0.0
        %1130 = vmatpush2.msra.mxu0 0.0
        %1131 = vmatprep.subr.mxu0 0.0
        %1132 = vmatpush2.msra.mxu0 0.0
        %1133 = vmatprep.subr.mxu0 0.0
        %1134 = vmatpush2.msra.mxu0 0.0
        %1135 = vmatprep.subr.mxu0 0.0
        %1136 = vmatpush2.msra.mxu0 0.0
        %1137 = vmatprep.subr.mxu0 0.0
        %1138 = vmatpush2.msra.mxu0 0.0
        %1139 = vmatprep.subr.mxu0 0.0
        %1140 = vmatpush2.msra.mxu0 0.0
        %1141 = vmatprep.subr.mxu0 0.0
        %1142 = vmatpush2.msra.mxu0 0.0
        %1143 = vmatprep.subr.mxu0 0.0
        %1144 = vmatpush2.msra.mxu0 0.0
        %1145 = vmatprep.subr.mxu0 0.0
        %1146 = vmatpush2.msra.mxu0 0.0
        %1147 = vmatprep.subr.mxu0 0.0
        %1148 = vmatpush2.msra.mxu0 0.0
        %1149 = vmatprep.subr.mxu0 0.0
        %1150 = vmatpush2.msra.mxu0 0.0
        %1151 = vmatprep.subr.mxu0 0.0
        %1152 = vmatpush2.msra.mxu0 0.0
        %1153 = vmatprep.subr.mxu0 0.0
        %1154 = vmatpush2.msra.mxu0 0.0
        %1155 = vmatprep.mubr.f32.mxu0 0.0
        %1156 = vmatmul.mubr.f32.gmra.mxu0 %v1086
        %v1157 = vpop.f32.mrf.mxu0
        %v1158 = vadd.f32 %v1083, %v1157
        %v1159 = vpop.f32.mrf.mxu0
        %1160 = vmatprep.mubr.f32.mxu0 0.0
        %1161 = vmatmul.mubr.f32.gmra.mxu0 %v1089
        %v1162 = vpop.f32.mrf.mxu0
        %v1163 = vadd.f32 %v1083, %v1162
        %v1164 = vpop.f32.mrf.mxu0
        %1165 = vdwg.mxu0
        %v1166 = vsel %vm597, %v1158, 0.0
        %1167 = vadd.xlane.f32.xlu0 %v1166
        %v1168 = vpop.xlane.xlu0 %1167
        %v1169 = vsel %vm597, %v1163, 0.0
        %1170 = vadd.xlane.f32.xlu0 %v1169
        %v1171 = vpop.xlane.xlu0 %1170
        %v1172 = vrcp.pop 32.0
        %v1173 = vmul.f32 %v1168, %v1172
        %v1174 = vmul.f32 %v1171, %v1172
        %v1175 = vsub.f32 %v1158, %v1173
        %v1176 = vsub.f32 %v1163, %v1174
        %v1177 = vmul.f32 %v1175, %v1175
        %v1178 = vmul.f32 %v1176, %v1176
        %v1179 = vsel %vm597, %v1177, 0.0
        %1180 = vadd.xlane.f32.xlu0 %v1179
        %v1181 = vpop.xlane.xlu0 %1180
        %v1182 = vsel %vm597, %v1178, 0.0
        %1183 = vadd.xlane.f32.xlu0 %v1182
        %v1184 = vpop.xlane.xlu0 %1183
        %v1185 = vmul.f32 %v1181, %v1172
        %v1186 = vmul.f32 %v1184, %v1172
        %v1187 = vadd.f32 %v1185, 1e-05
        %v1188 = vadd.f32 %v1186, 1e-05
        %v1189 = vrsqrt.pop %v1187
        %v1190 = vrsqrt.pop %v1188
        %v1191 = vmul.f32 %v1175, %v1189
        %v1192 = vmul.f32 %v1176, %v1190
        %v1193 = vld [vmem:[%s568] sm:$0x1]
        %v1195 = vlaneseq
        %v1196 = vshrl.u32 %v1195, 7
        %v1197 = vsub.s32 0, %v1196
        %v1198 = vrot.slane %v1193, %v1197
        %v1200 = vmul.f32 %v1191, %v1198
        %v1201 = vmul.f32 %v1192, %v1198
        %v1202 = vld [vmem:[%s571] sm:$0x1]
        %v1204 = vlaneseq
        %v1205 = vshrl.u32 %v1204, 7
        %v1206 = vsub.s32 0, %v1205
        %v1207 = vrot.slane %v1202, %v1206
        %v1209 = vadd.f32 %v1200, %v1207
        %v1210 = vadd.f32 %v1201, %v1207
        %v1211 = vmax.f32 %v1209, 0.0
        %v1212 = vmax.f32 %v1210, 0.0
        %v1213 = vadd.f32 %v1211, %v582
        %v1214 = vadd.f32 %v1212, %v583
        %1215 = vst.msk [vmem:[#allocation2] sm:$0xff] %vm597, %v1213
        %1216 = vst.msk [vmem:[#allocation2 + $0x8] sm:$0xff] %vm597, %v1214
        %p1217 = scmp.eq.s32.totalorder %s29, 1
        // Predicated region
        $region85: #{tpu_custom_call.1} parent=59 // pred_check
          %p1218 = pneg %p1217
        $region86: #{tpu_custom_call.1} parent=59 // pred_check_branch
          %1220 = sbr.rel (%p1218) target = $region88
        $region87: #{tpu_custom_call.1} parent=59 // pred_region
          %1221 = vst.msk [vmem:[#allocation11] sm:$0xff] %vm597, %v1213
          %1222 = vst.msk [vmem:[#allocation11 + $0x8] sm:$0xff] %vm597, %v1214
        $region88: #{tpu_custom_call.1} parent=59 // pred_fallthru
          _
        // Predicated region
        $region89: #{tpu_custom_call.1} parent=59 // pred_check
          %p1223 = pneg %p314
        $region90: #{tpu_custom_call.1} parent=59 // pred_check_branch
          %1225 = sbr.rel (%p1223) target = $region92
        $region91: #{tpu_custom_call.1} parent=59 // pred_region
          %s1226 = smul.u32 2, %s28
          %s1228 = ssub.s32 256, 256
          %1229 = vsyncadd [#allocation5], %s1228
          %s1230 = smul.addr %s1226, 128
          %s1231 = scalar_lea.hbm %s10, %s1230
          %s1232 = sshll.u32 [#allocation11], 4
          %s1233 = int_to_ptr.vmem [resolvable:$true] %s1232
          %1238 = dma.vmem_to_hbm [thread:$0]  %s1233, 256, %s1231, [#allocation5], 128, 128, 8
        $region92: #{tpu_custom_call.1} parent=59 // pred_fallthru
          _
        // Predicated region
        $region93: #{tpu_custom_call.1} parent=59 // pred_check
          %p1239 = pneg %p314
        $region94: #{tpu_custom_call.1} parent=59 // pred_check_branch
          %1241 = sbr.rel (%p1239) target = $region96
        $region95: #{tpu_custom_call.1} parent=59 // pred_region
          %1242 = dma.done [#allocation5], 256
        $region96: #{tpu_custom_call.1} parent=59 // pred_fallthru
          _
      $region60: #{tpu_custom_call.1} parent=5 // pred_fallthru
        _
      %p1243 = scmp.le.s32.totalorder 2, %s19
      // Predicated region
      $region97: #{tpu_custom_call.1} parent=5 // pred_check
        %p1244 = pneg %p1243
      $region98: #{tpu_custom_call.1} parent=5 // pred_check_branch
        %1246 = sbr.rel (%p1244) target = $region100
      $region99: #{tpu_custom_call.1} parent=5 // pred_region
        %s1247 = ssub.s32 %s19, 2
      $region100: #{tpu_custom_call.1} parent=5 // pred_fallthru
        _
    $region6: #{tpu_custom_call.1} parent=1 // loop_footer
      %s23 = sadd.s32 1, %s19
    $region7: #{tpu_custom_call.1} parent=1 // loop_footer_branch
      %18 = sbr.rel target = $region3
    $region8: #{tpu_custom_call.1} parent=1 // loop_exit
      _
    %1248 = vsyncpa [#allocation4], 1
    %s1249 = scalar_lea.sflag [#allocation4], 1
    %1250 = vsyncpa %s1249, 1
    %1251 = vsyncpa [#allocation7], 1
    %1252 = vsyncpa [#allocation5], 1
    %s1253 = scalar_lea.sflag [#allocation5], 1
    %1254 = vsyncpa %s1253, 1

</llo_original>
